<compile_context>
chip_gen: v5e
topology: v5e:2x2
jax: 0.10.0
libtpu: 0.0.40
codegen_flags: <defaults>
</compile_context>

<pallas_src>
import math

import numpy as np
import jax
import jax.numpy as jnp
from jax.experimental import pallas as pl
from jax.experimental.pallas import tpu as pltpu


# --------------------------------------------------------------------------
# Encoder geometry (fixed by the synthetic instantiation)
# --------------------------------------------------------------------------
K1, S1, C_IN, C1 = 3, 2, 4, 16
K2, S2, C2 = 3, 2, 32
H_IN = W_IN = 16
OH1 = (H_IN - K1) // S1 + 1          # 7
OW1 = (W_IN - K1) // S1 + 1          # 7
OH2 = (OH1 - K2) // S2 + 1           # 3
OW2 = (OW1 - K2) // S2 + 1           # 3
N_POS = OH2 * OW2                    # 9 conv2 output positions
N_OFF = K2 * K2                      # 9 conv2 kernel offsets
KP1 = K1 * K1 * C_IN                 # 36 conv1 patch features
KCAT = N_OFF * KP1                   # 324: conv1 patches for all conv2 offsets


# --------------------------------------------------------------------------
# Fused Pallas kernel: conv1 -> conv2 -> fc -> q1 -> q2
# --------------------------------------------------------------------------
def _spr_fused_kernel(p2_ref, w1_ref, b1_ref, w2_ref, b2_ref,
                      wfc_ref, bfc_ref, wq1_ref, bq1_ref, wq2_ref, bq2_ref,
                      state_ref, q_ref):
    n_pos = wfc_ref.shape[0]            # 9 conv2 output positions
    tb = state_ref.shape[0]             # batch-tile rows (multiple of 8)

    # conv1 on all 9 conv2-offset patches at once: block-diagonal kron(I9,Wc1)
    # turns it into ONE lane-dense GEMM (K=324, N=144) whose output rows are
    # exactly conv2's im2col rows.  Bias + ReLU applied once.
    h1 = jnp.dot(p2_ref[...], w1_ref[...], preferred_element_type=jnp.float32)
    h1 = jnp.maximum(h1 + b1_ref[...], 0.0)                 # (n_pos*tb, 144)

    # conv2: one K=144 GEMM.
    h2 = jnp.dot(h1, w2_ref[...], preferred_element_type=jnp.float32)
    h2 = jnp.maximum(h2 + b2_ref[...], 0.0)                 # (n_pos*tb, 32)

    # flatten + fc: contract the 9 conv2 positions.  Rows are position-major,
    # batch-minor, so every slice is an aligned (tb x 32) sublane block.
    # TODO(synk): could fuse into one K=288 GEMM via an in-kernel
    #             (n_pos*tb,32)->(tb,288) relayout; kept as aligned-slice dots
    #             for lowering robustness (relayout cost ~ the 9 tiny dots).
    accf = jnp.dot(h2[0:tb, :], wfc_ref[0], preferred_element_type=jnp.float32)
    for p in range(1, n_pos):
        accf = accf + jnp.dot(h2[p * tb:(p + 1) * tb, :], wfc_ref[p],
                              preferred_element_type=jnp.float32)
    state = jnp.maximum(accf + bfc_ref[...], 0.0)           # (tb, hidden)
    state_ref[...] = state.astype(state_ref.dtype)

    # Q head.  argmax is computed in the wrapper from the f32 Q output (the
    # in-kernel 1-lane argmax store was a masked-vst stream with no benefit).
    qh = jnp.dot(state, wq1_ref[...], preferred_element_type=jnp.float32) + bq1_ref[...]
    qh = jnp.maximum(qh, 0.0)
    qv = jnp.dot(qh, wq2_ref[...], preferred_element_type=jnp.float32) + bq2_ref[...]
    q_ref[...] = qv.astype(q_ref.dtype)


# --------------------------------------------------------------------------
# pallas_call wrapper: batch-tiled "parallel" grid, weights resident in VMEM
# --------------------------------------------------------------------------
def spr_fused_pallas(p2cat, kparams, *, n_tiles, tile_b):
    hidden = kparams["w_fc"].shape[-1]
    q_hidden = kparams["w_q1"].shape[-1]
    act_dim = kparams["w_q2"].shape[-1]
    b_pad = n_tiles * tile_b
    rows_blk = N_POS * tile_b

    weights = (kparams["w1_bd"], kparams["b1_t"],
               kparams["w_c2"], kparams["b_c2"],
               kparams["w_fc"], kparams["b_fc"],
               kparams["w_q1"], kparams["b_q1"],
               kparams["w_q2"], kparams["b_q2"])

    def resident(a):
        # Full-array block with a constant index map: DMA'd once, then reused
        # across all batch tiles (no per-step re-copy).
        return pl.BlockSpec(a.shape, lambda i, nd=a.ndim: (0,) * nd)

    in_specs = ([pl.BlockSpec((rows_blk, KCAT), lambda i: (i, 0))]
                + [resident(w) for w in weights])
    out_specs = (pl.BlockSpec((tile_b, hidden), lambda i: (i, 0)),
                 pl.BlockSpec((tile_b, act_dim), lambda i: (i, 0)))
    out_shape = (jax.ShapeDtypeStruct((b_pad, hidden), jnp.float32),   # state
                 jax.ShapeDtypeStruct((b_pad, act_dim), jnp.float32))  # evalQ

    flops = 2 * (n_tiles * rows_blk * (KCAT * kparams["w1_bd"].shape[1]
                                       + kparams["w_c2"].shape[0] * C2)
                 + b_pad * (N_POS * C2 * hidden + hidden * q_hidden
                            + q_hidden * act_dim))
    bytes_accessed = (p2cat.size * 4
                      + sum(int(w.size) * 4 for w in weights)
                      + b_pad * (hidden + act_dim) * 4)

    return pl.pallas_call(
        _spr_fused_kernel,
        out_shape=out_shape,
        grid_spec=pltpu.PrefetchScalarGridSpec(
            num_scalar_prefetch=0,
            grid=(n_tiles,),
            in_specs=in_specs,
            out_specs=out_specs),
        compiler_params=pltpu.CompilerParams(
            dimension_semantics=("parallel",)),
        cost_estimate=pl.CostEstimate(flops=flops, transcendentals=0,
                                      bytes_accessed=bytes_accessed),
    )(p2cat, *weights)


# --------------------------------------------------------------------------
# Wrapper glue: double im2col as ONE precomputed gather (index shuffling only)
# --------------------------------------------------------------------------
def _double_im2col_indices():
    """idx[p, q*36 + (di*3+dj)*C + c] = flat NHWC index of the input pixel
    feeding conv2 output position p, conv2 offset q=(i,j), conv1 tap (di,dj,c)."""
    idx = np.empty((N_POS, KCAT), np.int32)
    for oy in range(OH2):
        for ox in range(OW2):
            p = oy * OW2 + ox
            f = 0
            for i in range(K2):
                for j in range(K2):
                    y1, x1 = S2 * oy + i, S2 * ox + j       # conv1 output pos
                    for di in range(K1):
                        for dj in range(K1):
                            h, w = S1 * y1 + di, S1 * x1 + dj
                            for c in range(C_IN):
                                idx[p, f] = (h * W_IN + w) * C_IN + c
                                f += 1
    return idx


_GATHER_IDX = _double_im2col_indices()


# --------------------------------------------------------------------------
# Parameters: natural layouts + one-time kernel-layout packing
# --------------------------------------------------------------------------
def init_params(key, in_ch=C_IN, action_dim=6, hidden=32, q_hidden=64):
    ks = jax.random.split(key, 10)
    s = 0.1
    return {
        "w_c1": s * jax.random.normal(ks[0], (K1 * K1 * in_ch, C1), jnp.float32),
        "b_c1": s * jax.random.normal(ks[1], (1, C1), jnp.float32),
        "w_c2": s * jax.random.normal(ks[2], (N_OFF, C1, C2), jnp.float32),
        "b_c2": s * jax.random.normal(ks[3], (1, C2), jnp.float32),
        "w_fc": s * jax.random.normal(ks[4], (N_POS, C2, hidden), jnp.float32),
        "b_fc": s * jax.random.normal(ks[5], (1, hidden), jnp.float32),
        "w_q1": s * jax.random.normal(ks[6], (hidden, q_hidden), jnp.float32),
        "b_q1": s * jax.random.normal(ks[7], (1, q_hidden), jnp.float32),
        "w_q2": s * jax.random.normal(ks[8], (q_hidden, action_dim), jnp.float32),
        "b_q2": s * jax.random.normal(ks[9], (1, action_dim), jnp.float32),
    }


def pack_params(params):
    """One-time weight relayout for the fused kernel (hoisted out of forward)."""
    w1_bd = jnp.kron(jnp.eye(N_OFF, dtype=jnp.float32), params["w_c1"])  # (324,144)
    return {
        "w1_bd": w1_bd,
        "b1_t": jnp.tile(params["b_c1"], (1, N_OFF)),                    # (1,144)
        "w_c2": params["w_c2"].reshape(N_OFF * C1, C2),                  # (144,32)
        "b_c2": params["b_c2"],
        "w_fc": params["w_fc"],                                          # (9,32,h)
        "b_fc": params["b_fc"],
        "w_q1": params["w_q1"], "b_q1": params["b_q1"],
        "w_q2": params["w_q2"], "b_q2": params["b_q2"],
    }


# --------------------------------------------------------------------------
# SPR_Policy.forward
# --------------------------------------------------------------------------
def spr_policy_forward(kparams, x_nchw, *, tile_b=256):
    B = x_nchw.shape[0]
    tb = tile_b if B >= tile_b else max(8, -(-B // 8) * 8)   # multiple of 8
    n_tiles = -(-B // tb)
    b_pad = n_tiles * tb

    # Double im2col as one gather + pad/relayout into (tile, position, batch)
    # row order — pure index shuffling done by XLA, ~6 HLO ops total.
    x = jnp.transpose(x_nchw, (0, 2, 3, 1)).astype(jnp.float32)         # NHWC
    xf = x.reshape(B, H_IN * W_IN * C_IN)
    pat = jnp.take(xf, jnp.asarray(_GATHER_IDX.reshape(-1)), axis=1)
    pat = pat.reshape(B, N_POS, KCAT)
    pat = jnp.pad(pat, ((0, b_pad - B), (0, 0), (0, 0)))
    p2cat = (pat.reshape(n_tiles, tb, N_POS, KCAT)
                .transpose(0, 2, 1, 3)
                .reshape(n_tiles * N_POS * tb, KCAT))

    state_p, q_p = spr_fused_pallas(p2cat, kparams, n_tiles=n_tiles, tile_b=tb)

    features = {"state": state_p[:B]}
    evalQ = q_p[:B]
    # torch.argmax returns int64; JAX (x64 disabled) yields int32.
    argmax_action = jnp.argmax(evalQ, axis=-1)
    return features, argmax_action, evalQ


# --------------------------------------------------------------------------
# Pure-JAX reference (standard im2col formulation) for correctness checking
# --------------------------------------------------------------------------
def _im2col_ref(x, k, s):
    B, H, W, C = x.shape
    oh = (H - k) // s + 1
    ow = (W - k) // s + 1
    pats = []
    for i in range(k):
        for j in range(k):
            pats.append(x[:, i:i + s * oh:s, j:j + s * ow:s, :])
    p = jnp.stack(pats, axis=3)
    return p.reshape(B * oh * ow, k * k * C), oh, ow


def spr_policy_forward_ref(params, x_nchw):
    B = x_nchw.shape[0]
    x = jnp.transpose(x_nchw, (0, 2, 3, 1)).astype(jnp.float32)
    p1, oh1, ow1 = _im2col_ref(x, K1, S1)
    h1 = jnp.maximum(p1 @ params["w_c1"] + params["b_c1"], 0.0).reshape(B, oh1, ow1, -1)
    p2, oh2, ow2 = _im2col_ref(h1, K2, S2)
    w_c2 = params["w_c2"].reshape(-1, params["w_c2"].shape[-1])
    h2 = jnp.maximum(p2 @ w_c2 + params["b_c2"], 0.0).reshape(B, oh2, ow2, -1)
    flat = h2.reshape(B, -1)
    w_fc = params["w_fc"].reshape(-1, params["w_fc"].shape[-1])
    state = jnp.maximum(flat @ w_fc + params["b_fc"], 0.0)
    qh = jnp.maximum(state @ params["w_q1"] + params["b_q1"], 0.0)
    evalQ = qh @ params["w_q2"] + params["b_q2"]
    return {"state": state}, jnp.argmax(evalQ, axis=-1), evalQ


if __name__ == "__main__":
    key = jax.random.PRNGKey(0)
    k_param, k_x = jax.random.split(key)
    params = init_params(k_param, in_ch=4, action_dim=6, hidden=32, q_hidden=64)
    kparams = pack_params(params)

    # NCHW input consistent with the module's conv forward: (B=2, C=4, 16x16)
    x = jax.random.normal(k_x, (2, 4, 16, 16), jnp.float32)

    fwd = jax.jit(spr_policy_forward)
    features, argmax_action, evalQ = jax.block_until_ready(fwd(kparams, x))
    f_ref, a_ref, q_ref = spr_policy_forward_ref(params, x)

    assert features["state"].shape == (2, 32)
    assert evalQ.shape == (2, 6)
    assert argmax_action.shape == (2,)
    assert jnp.allclose(features["state"], f_ref["state"], atol=1e-4, rtol=1e-4)
    assert jnp.allclose(evalQ, q_ref, atol=1e-4, rtol=1e-4)
    assert jnp.array_equal(argmax_action, a_ref)

    print("KERNEL_OK")
</pallas_src>

<mosaic_0001>
module attributes {stable_mosaic.version = 11 : i64} {
  func.func @_spr_fused_kernel(%arg0: i32, %arg1: memref<72x324xf32, #tpu.memory_space<vmem>>, %arg2: memref<324x144xf32, #tpu.memory_space<vmem>>, %arg3: memref<1x144xf32, #tpu.memory_space<vmem>>, %arg4: memref<144x32xf32, #tpu.memory_space<vmem>>, %arg5: memref<1x32xf32, #tpu.memory_space<vmem>>, %arg6: memref<9x32x32xf32, #tpu.memory_space<vmem>>, %arg7: memref<1x32xf32, #tpu.memory_space<vmem>>, %arg8: memref<32x64xf32, #tpu.memory_space<vmem>>, %arg9: memref<1x64xf32, #tpu.memory_space<vmem>>, %arg10: memref<64x6xf32, #tpu.memory_space<vmem>>, %arg11: memref<1x6xf32, #tpu.memory_space<vmem>>, %arg12: memref<8x32xf32, #tpu.memory_space<vmem>>, %arg13: memref<8x6xf32, #tpu.memory_space<vmem>>) attributes {dimension_semantics = [#tpu.dimension_semantics<parallel>], iteration_bounds = array<i64: 1>, scalar_prefetch = 0 : i64, scratch_operands = 0 : i64, tpu.core_type = #tpu.core_type<tc>, window_params = [{transform_indices = @transform_0, window_bounds = array<i64: 72, 324>}, {pipeline_mode = #tpu.pipeline_mode<synchronous>, transform_indices = @transform_1, window_bounds = array<i64: 324, 144>}, {pipeline_mode = #tpu.pipeline_mode<synchronous>, transform_indices = @transform_2, window_bounds = array<i64: 1, 144>}, {pipeline_mode = #tpu.pipeline_mode<synchronous>, transform_indices = @transform_3, window_bounds = array<i64: 144, 32>}, {pipeline_mode = #tpu.pipeline_mode<synchronous>, transform_indices = @transform_4, window_bounds = array<i64: 1, 32>}, {pipeline_mode = #tpu.pipeline_mode<synchronous>, transform_indices = @transform_5, window_bounds = array<i64: 9, 32, 32>}, {pipeline_mode = #tpu.pipeline_mode<synchronous>, transform_indices = @transform_6, window_bounds = array<i64: 1, 32>}, {pipeline_mode = #tpu.pipeline_mode<synchronous>, transform_indices = @transform_7, window_bounds = array<i64: 32, 64>}, {pipeline_mode = #tpu.pipeline_mode<synchronous>, transform_indices = @transform_8, window_bounds = array<i64: 1, 64>}, {pipeline_mode = #tpu.pipeline_mode<synchronous>, transform_indices = @transform_9, window_bounds = array<i64: 64, 6>}, {pipeline_mode = #tpu.pipeline_mode<synchronous>, transform_indices = @transform_10, window_bounds = array<i64: 1, 6>}, {transform_indices = @transform_11, window_bounds = array<i64: 8, 32>}, {transform_indices = @transform_12, window_bounds = array<i64: 8, 6>}]} {
    %c0 = arith.constant 0 : index
    %c0_0 = arith.constant 0 : index
    %0 = vector.load %arg1[%c0, %c0_0] : memref<72x324xf32, #tpu.memory_space<vmem>>, vector<72x324xf32>
    %c0_1 = arith.constant 0 : index
    %c0_2 = arith.constant 0 : index
    %1 = vector.load %arg2[%c0_1, %c0_2] : memref<324x144xf32, #tpu.memory_space<vmem>>, vector<324x144xf32>
    %cst = arith.constant dense<0.000000e+00> : vector<72x144xf32>
    %2 = tpu.matmul %0, %1, %cst {dimension_numbers = #tpu.dot_dimension_numbers<[1], [0], [0], [1], [0, 0, 1, 1], [], []>} : vector<72x324xf32>, vector<324x144xf32>, vector<72x144xf32> -> vector<72x144xf32>
    %c0_3 = arith.constant 0 : index
    %c0_4 = arith.constant 0 : index
    %3 = vector.load %arg3[%c0_3, %c0_4] : memref<1x144xf32, #tpu.memory_space<vmem>>, vector<1x144xf32>
    %4 = vector.broadcast %3 : vector<1x144xf32> to vector<72x144xf32>
    %5 = arith.addf %2, %4 : vector<72x144xf32>
    %cst_5 = arith.constant 0.000000e+00 : f32
    %6 = vector.broadcast %cst_5 : f32 to vector<72x144xf32>
    %7 = arith.maximumf %5, %6 : vector<72x144xf32>
    %c0_6 = arith.constant 0 : index
    %c0_7 = arith.constant 0 : index
    %8 = vector.load %arg4[%c0_6, %c0_7] : memref<144x32xf32, #tpu.memory_space<vmem>>, vector<144x32xf32>
    %cst_8 = arith.constant dense<0.000000e+00> : vector<72x32xf32>
    %9 = tpu.matmul %7, %8, %cst_8 {dimension_numbers = #tpu.dot_dimension_numbers<[1], [0], [0], [1], [0, 0, 1, 1], [], []>} : vector<72x144xf32>, vector<144x32xf32>, vector<72x32xf32> -> vector<72x32xf32>
    %c0_9 = arith.constant 0 : index
    %c0_10 = arith.constant 0 : index
    %10 = vector.load %arg5[%c0_9, %c0_10] : memref<1x32xf32, #tpu.memory_space<vmem>>, vector<1x32xf32>
    %11 = vector.broadcast %10 : vector<1x32xf32> to vector<72x32xf32>
    %12 = arith.addf %9, %11 : vector<72x32xf32>
    %cst_11 = arith.constant 0.000000e+00 : f32
    %13 = vector.broadcast %cst_11 : f32 to vector<72x32xf32>
    %14 = arith.maximumf %12, %13 : vector<72x32xf32>
    %15 = vector.extract_strided_slice %14 {offsets = [0, 0], sizes = [8, 32], strides = [1, 1]} : vector<72x32xf32> to vector<8x32xf32>
    %c0_12 = arith.constant 0 : index
    %c0_13 = arith.constant 0 : index
    %c0_14 = arith.constant 0 : index
    %16 = vector.load %arg6[%c0_12, %c0_13, %c0_14] : memref<9x32x32xf32, #tpu.memory_space<vmem>>, vector<1x32x32xf32>
    %17 = vector.shape_cast %16 : vector<1x32x32xf32> to vector<32x32xf32>
    %cst_15 = arith.constant dense<0.000000e+00> : vector<8x32xf32>
    %18 = tpu.matmul %15, %17, %cst_15 {dimension_numbers = #tpu.dot_dimension_numbers<[1], [0], [0], [1], [0, 0, 1, 1], [], []>} : vector<8x32xf32>, vector<32x32xf32>, vector<8x32xf32> -> vector<8x32xf32>
    %19 = vector.extract_strided_slice %14 {offsets = [8, 0], sizes = [8, 32], strides = [1, 1]} : vector<72x32xf32> to vector<8x32xf32>
    %c1 = arith.constant 1 : index
    %c0_16 = arith.constant 0 : index
    %c0_17 = arith.constant 0 : index
    %20 = vector.load %arg6[%c1, %c0_16, %c0_17] : memref<9x32x32xf32, #tpu.memory_space<vmem>>, vector<1x32x32xf32>
    %21 = vector.shape_cast %20 : vector<1x32x32xf32> to vector<32x32xf32>
    %cst_18 = arith.constant dense<0.000000e+00> : vector<8x32xf32>
    %22 = tpu.matmul %19, %21, %cst_18 {dimension_numbers = #tpu.dot_dimension_numbers<[1], [0], [0], [1], [0, 0, 1, 1], [], []>} : vector<8x32xf32>, vector<32x32xf32>, vector<8x32xf32> -> vector<8x32xf32>
    %23 = arith.addf %18, %22 : vector<8x32xf32>
    %24 = vector.extract_strided_slice %14 {offsets = [16, 0], sizes = [8, 32], strides = [1, 1]} : vector<72x32xf32> to vector<8x32xf32>
    %c2 = arith.constant 2 : index
    %c0_19 = arith.constant 0 : index
    %c0_20 = arith.constant 0 : index
    %25 = vector.load %arg6[%c2, %c0_19, %c0_20] : memref<9x32x32xf32, #tpu.memory_space<vmem>>, vector<1x32x32xf32>
    %26 = vector.shape_cast %25 : vector<1x32x32xf32> to vector<32x32xf32>
    %cst_21 = arith.constant dense<0.000000e+00> : vector<8x32xf32>
    %27 = tpu.matmul %24, %26, %cst_21 {dimension_numbers = #tpu.dot_dimension_numbers<[1], [0], [0], [1], [0, 0, 1, 1], [], []>} : vector<8x32xf32>, vector<32x32xf32>, vector<8x32xf32> -> vector<8x32xf32>
    %28 = arith.addf %23, %27 : vector<8x32xf32>
    %29 = vector.extract_strided_slice %14 {offsets = [24, 0], sizes = [8, 32], strides = [1, 1]} : vector<72x32xf32> to vector<8x32xf32>
    %c3 = arith.constant 3 : index
    %c0_22 = arith.constant 0 : index
    %c0_23 = arith.constant 0 : index
    %30 = vector.load %arg6[%c3, %c0_22, %c0_23] : memref<9x32x32xf32, #tpu.memory_space<vmem>>, vector<1x32x32xf32>
    %31 = vector.shape_cast %30 : vector<1x32x32xf32> to vector<32x32xf32>
    %cst_24 = arith.constant dense<0.000000e+00> : vector<8x32xf32>
    %32 = tpu.matmul %29, %31, %cst_24 {dimension_numbers = #tpu.dot_dimension_numbers<[1], [0], [0], [1], [0, 0, 1, 1], [], []>} : vector<8x32xf32>, vector<32x32xf32>, vector<8x32xf32> -> vector<8x32xf32>
    %33 = arith.addf %28, %32 : vector<8x32xf32>
    %34 = vector.extract_strided_slice %14 {offsets = [32, 0], sizes = [8, 32], strides = [1, 1]} : vector<72x32xf32> to vector<8x32xf32>
    %c4 = arith.constant 4 : index
    %c0_25 = arith.constant 0 : index
    %c0_26 = arith.constant 0 : index
    %35 = vector.load %arg6[%c4, %c0_25, %c0_26] : memref<9x32x32xf32, #tpu.memory_space<vmem>>, vector<1x32x32xf32>
    %36 = vector.shape_cast %35 : vector<1x32x32xf32> to vector<32x32xf32>
    %cst_27 = arith.constant dense<0.000000e+00> : vector<8x32xf32>
    %37 = tpu.matmul %34, %36, %cst_27 {dimension_numbers = #tpu.dot_dimension_numbers<[1], [0], [0], [1], [0, 0, 1, 1], [], []>} : vector<8x32xf32>, vector<32x32xf32>, vector<8x32xf32> -> vector<8x32xf32>
    %38 = arith.addf %33, %37 : vector<8x32xf32>
    %39 = vector.extract_strided_slice %14 {offsets = [40, 0], sizes = [8, 32], strides = [1, 1]} : vector<72x32xf32> to vector<8x32xf32>
    %c5 = arith.constant 5 : index
    %c0_28 = arith.constant 0 : index
    %c0_29 = arith.constant 0 : index
    %40 = vector.load %arg6[%c5, %c0_28, %c0_29] : memref<9x32x32xf32, #tpu.memory_space<vmem>>, vector<1x32x32xf32>
    %41 = vector.shape_cast %40 : vector<1x32x32xf32> to vector<32x32xf32>
    %cst_30 = arith.constant dense<0.000000e+00> : vector<8x32xf32>
    %42 = tpu.matmul %39, %41, %cst_30 {dimension_numbers = #tpu.dot_dimension_numbers<[1], [0], [0], [1], [0, 0, 1, 1], [], []>} : vector<8x32xf32>, vector<32x32xf32>, vector<8x32xf32> -> vector<8x32xf32>
    %43 = arith.addf %38, %42 : vector<8x32xf32>
    %44 = vector.extract_strided_slice %14 {offsets = [48, 0], sizes = [8, 32], strides = [1, 1]} : vector<72x32xf32> to vector<8x32xf32>
    %c6 = arith.constant 6 : index
    %c0_31 = arith.constant 0 : index
    %c0_32 = arith.constant 0 : index
    %45 = vector.load %arg6[%c6, %c0_31, %c0_32] : memref<9x32x32xf32, #tpu.memory_space<vmem>>, vector<1x32x32xf32>
    %46 = vector.shape_cast %45 : vector<1x32x32xf32> to vector<32x32xf32>
    %cst_33 = arith.constant dense<0.000000e+00> : vector<8x32xf32>
    %47 = tpu.matmul %44, %46, %cst_33 {dimension_numbers = #tpu.dot_dimension_numbers<[1], [0], [0], [1], [0, 0, 1, 1], [], []>} : vector<8x32xf32>, vector<32x32xf32>, vector<8x32xf32> -> vector<8x32xf32>
    %48 = arith.addf %43, %47 : vector<8x32xf32>
    %49 = vector.extract_strided_slice %14 {offsets = [56, 0], sizes = [8, 32], strides = [1, 1]} : vector<72x32xf32> to vector<8x32xf32>
    %c7 = arith.constant 7 : index
    %c0_34 = arith.constant 0 : index
    %c0_35 = arith.constant 0 : index
    %50 = vector.load %arg6[%c7, %c0_34, %c0_35] : memref<9x32x32xf32, #tpu.memory_space<vmem>>, vector<1x32x32xf32>
    %51 = vector.shape_cast %50 : vector<1x32x32xf32> to vector<32x32xf32>
    %cst_36 = arith.constant dense<0.000000e+00> : vector<8x32xf32>
    %52 = tpu.matmul %49, %51, %cst_36 {dimension_numbers = #tpu.dot_dimension_numbers<[1], [0], [0], [1], [0, 0, 1, 1], [], []>} : vector<8x32xf32>, vector<32x32xf32>, vector<8x32xf32> -> vector<8x32xf32>
    %53 = arith.addf %48, %52 : vector<8x32xf32>
    %54 = vector.extract_strided_slice %14 {offsets = [64, 0], sizes = [8, 32], strides = [1, 1]} : vector<72x32xf32> to vector<8x32xf32>
    %c8 = arith.constant 8 : index
    %c0_37 = arith.constant 0 : index
    %c0_38 = arith.constant 0 : index
    %55 = vector.load %arg6[%c8, %c0_37, %c0_38] : memref<9x32x32xf32, #tpu.memory_space<vmem>>, vector<1x32x32xf32>
    %56 = vector.shape_cast %55 : vector<1x32x32xf32> to vector<32x32xf32>
    %cst_39 = arith.constant dense<0.000000e+00> : vector<8x32xf32>
    %57 = tpu.matmul %54, %56, %cst_39 {dimension_numbers = #tpu.dot_dimension_numbers<[1], [0], [0], [1], [0, 0, 1, 1], [], []>} : vector<8x32xf32>, vector<32x32xf32>, vector<8x32xf32> -> vector<8x32xf32>
    %58 = arith.addf %53, %57 : vector<8x32xf32>
    %c0_40 = arith.constant 0 : index
    %c0_41 = arith.constant 0 : index
    %59 = vector.load %arg7[%c0_40, %c0_41] : memref<1x32xf32, #tpu.memory_space<vmem>>, vector<1x32xf32>
    %60 = vector.broadcast %59 : vector<1x32xf32> to vector<8x32xf32>
    %61 = arith.addf %58, %60 : vector<8x32xf32>
    %cst_42 = arith.constant 0.000000e+00 : f32
    %62 = vector.broadcast %cst_42 : f32 to vector<8x32xf32>
    %63 = arith.maximumf %61, %62 : vector<8x32xf32>
    %c0_43 = arith.constant 0 : index
    %c0_44 = arith.constant 0 : index
    %64 = vector.load %arg12[%c0_43, %c0_44] : memref<8x32xf32, #tpu.memory_space<vmem>>, vector<8x32xf32>
    tpu.vector_store %arg12[%c0_43, %c0_44], %63 {strides = array<i32>} : memref<8x32xf32, #tpu.memory_space<vmem>>, vector<8x32xf32>,
    %c0_45 = arith.constant 0 : index
    %c0_46 = arith.constant 0 : index
    %65 = vector.load %arg8[%c0_45, %c0_46] : memref<32x64xf32, #tpu.memory_space<vmem>>, vector<32x64xf32>
    %cst_47 = arith.constant dense<0.000000e+00> : vector<8x64xf32>
    %66 = tpu.matmul %63, %65, %cst_47 {dimension_numbers = #tpu.dot_dimension_numbers<[1], [0], [0], [1], [0, 0, 1, 1], [], []>} : vector<8x32xf32>, vector<32x64xf32>, vector<8x64xf32> -> vector<8x64xf32>
    %c0_48 = arith.constant 0 : index
    %c0_49 = arith.constant 0 : index
    %67 = vector.load %arg9[%c0_48, %c0_49] : memref<1x64xf32, #tpu.memory_space<vmem>>, vector<1x64xf32>
    %68 = vector.broadcast %67 : vector<1x64xf32> to vector<8x64xf32>
    %69 = arith.addf %66, %68 : vector<8x64xf32>
    %cst_50 = arith.constant 0.000000e+00 : f32
    %70 = vector.broadcast %cst_50 : f32 to vector<8x64xf32>
    %71 = arith.maximumf %69, %70 : vector<8x64xf32>
    %c0_51 = arith.constant 0 : index
    %c0_52 = arith.constant 0 : index
    %72 = vector.load %arg10[%c0_51, %c0_52] : memref<64x6xf32, #tpu.memory_space<vmem>>, vector<64x6xf32>
    %cst_53 = arith.constant dense<0.000000e+00> : vector<8x6xf32>
    %73 = tpu.matmul %71, %72, %cst_53 {dimension_numbers = #tpu.dot_dimension_numbers<[1], [0], [0], [1], [0, 0, 1, 1], [], []>} : vector<8x64xf32>, vector<64x6xf32>, vector<8x6xf32> -> vector<8x6xf32>
    %c0_54 = arith.constant 0 : index
    %c0_55 = arith.constant 0 : index
    %74 = vector.load %arg11[%c0_54, %c0_55] : memref<1x6xf32, #tpu.memory_space<vmem>>, vector<1x6xf32>
    %75 = vector.broadcast %74 : vector<1x6xf32> to vector<8x6xf32>
    %76 = arith.addf %73, %75 : vector<8x6xf32>
    %c0_56 = arith.constant 0 : index
    %c0_57 = arith.constant 0 : index
    %77 = vector.load %arg13[%c0_56, %c0_57] : memref<8x6xf32, #tpu.memory_space<vmem>>, vector<8x6xf32>
    tpu.vector_store %arg13[%c0_56, %c0_57], %76 {strides = array<i32>} : memref<8x6xf32, #tpu.memory_space<vmem>>, vector<8x6xf32>,
    return
  }
  func.func @transform_0(%arg0: i32) -> (i32, i32) {
    %c0_i32 = arith.constant 0 : i32
    %c0_i32_0 = arith.constant 0 : i32
    return %arg0, %c0_i32 : i32, i32
  }
  func.func @transform_1(%arg0: i32) -> (i32, i32) {
    %c0_i32 = arith.constant 0 : i32
    %c0_i32_0 = arith.constant 0 : i32
    %c0_i32_1 = arith.constant 0 : i32
    return %c0_i32, %c0_i32_0 : i32, i32
  }
  func.func @transform_2(%arg0: i32) -> (i32, i32) {
    %c0_i32 = arith.constant 0 : i32
    %c0_i32_0 = arith.constant 0 : i32
    %c0_i32_1 = arith.constant 0 : i32
    return %c0_i32, %c0_i32_0 : i32, i32
  }
  func.func @transform_3(%arg0: i32) -> (i32, i32) {
    %c0_i32 = arith.constant 0 : i32
    %c0_i32_0 = arith.constant 0 : i32
    %c0_i32_1 = arith.constant 0 : i32
    return %c0_i32, %c0_i32_0 : i32, i32
  }
  func.func @transform_4(%arg0: i32) -> (i32, i32) {
    %c0_i32 = arith.constant 0 : i32
    %c0_i32_0 = arith.constant 0 : i32
    %c0_i32_1 = arith.constant 0 : i32
    return %c0_i32, %c0_i32_0 : i32, i32
  }
  func.func @transform_5(%arg0: i32) -> (i32, i32, i32) {
    %c0_i32 = arith.constant 0 : i32
    %c0_i32_0 = arith.constant 0 : i32
    %c0_i32_1 = arith.constant 0 : i32
    %c0_i32_2 = arith.constant 0 : i32
    return %c0_i32, %c0_i32_0, %c0_i32_1 : i32, i32, i32
  }
  func.func @transform_6(%arg0: i32) -> (i32, i32) {
    %c0_i32 = arith.constant 0 : i32
    %c0_i32_0 = arith.constant 0 : i32
    %c0_i32_1 = arith.constant 0 : i32
    return %c0_i32, %c0_i32_0 : i32, i32
  }
  func.func @transform_7(%arg0: i32) -> (i32, i32) {
    %c0_i32 = arith.constant 0 : i32
    %c0_i32_0 = arith.constant 0 : i32
    %c0_i32_1 = arith.constant 0 : i32
    return %c0_i32, %c0_i32_0 : i32, i32
  }
  func.func @transform_8(%arg0: i32) -> (i32, i32) {
    %c0_i32 = arith.constant 0 : i32
    %c0_i32_0 = arith.constant 0 : i32
    %c0_i32_1 = arith.constant 0 : i32
    return %c0_i32, %c0_i32_0 : i32, i32
  }
  func.func @transform_9(%arg0: i32) -> (i32, i32) {
    %c0_i32 = arith.constant 0 : i32
    %c0_i32_0 = arith.constant 0 : i32
    %c0_i32_1 = arith.constant 0 : i32
    return %c0_i32, %c0_i32_0 : i32, i32
  }
  func.func @transform_10(%arg0: i32) -> (i32, i32) {
    %c0_i32 = arith.constant 0 : i32
    %c0_i32_0 = arith.constant 0 : i32
    %c0_i32_1 = arith.constant 0 : i32
    return %c0_i32, %c0_i32_0 : i32, i32
  }
  func.func @transform_11(%arg0: i32) -> (i32, i32) {
    %c0_i32 = arith.constant 0 : i32
    %c0_i32_0 = arith.constant 0 : i32
    return %arg0, %c0_i32 : i32, i32
  }
  func.func @transform_12(%arg0: i32) -> (i32, i32) {
    %c0_i32 = arith.constant 0 : i32
    %c0_i32_0 = arith.constant 0 : i32
    return %arg0, %c0_i32 : i32, i32
  }
}

</mosaic_0001>

<llo_original>
// kernel: spr_policy_forward.1
$region0: #{spr_policy_forward.1}
  #allocation0 [shape = 'u32[]', space=smem, size = 0x4, offset = 0x4, fixed_abs, tag = 'smem constant byte address 0x4 - core index']
  #allocation1 [shape = 'u32[72,128]{1,0:T(1,128)}', space=vmem, size = 0x9000, scoped, tag = 'internal scratch']
  %s0 = inlined_call_operand.vmem [shape: f32[72,324], index: 0, kind: input, shape index: {}]
  %s1 = inlined_call_operand.vmem [shape: f32[324,144], index: 1, kind: input, shape index: {}]
  %s2 = inlined_call_operand.vmem [shape: f32[1,144], index: 2, kind: input, shape index: {}]
  %s3 = inlined_call_operand.vmem [shape: f32[144,32], index: 3, kind: input, shape index: {}]
  %s4 = inlined_call_operand.vmem [shape: f32[1,32], index: 4, kind: input, shape index: {}]
  %s5 = inlined_call_operand.vmem [shape: f32[9,32,32], index: 5, kind: input, shape index: {}]
  %s6 = inlined_call_operand.vmem [shape: f32[1,32], index: 6, kind: input, shape index: {}]
  %s7 = inlined_call_operand.vmem [shape: f32[32,64], index: 7, kind: input, shape index: {}]
  %s8 = inlined_call_operand.vmem [shape: f32[1,64], index: 8, kind: input, shape index: {}]
  %s9 = inlined_call_operand.vmem [shape: f32[64,6], index: 9, kind: input, shape index: {}]
  %s10 = inlined_call_operand.vmem [shape: f32[1,6], index: 10, kind: input, shape index: {}]
  %s11 = inlined_call_operand.vmem [shape: f32[8,32], index: 11, kind: output, shape index: {0}]
  %s12 = inlined_call_operand.vmem [shape: f32[8,6], index: 12, kind: output, shape index: {1}]
  %13 = xla_tuple %s11, %s12
  %s14 = sld [smem:[#allocation0]]
  $region62: #{spr_policy_forward.1} parent=0
    _
  %s16 = ssub.s32 1, %s14
  %s17 = scalar_select 0, %s16, %s14
  // Predicated region
  $region2: #{spr_policy_forward.1} parent=0 // pred_check
    _
  $region3: #{spr_policy_forward.1} parent=0 // pred_check_branch
    %19 = sbr.rel (0) target = $region5
  $region4: #{spr_policy_forward.1} parent=0 // pred_region
    _
  $region5: #{spr_policy_forward.1} parent=0 // pred_fallthru
    _
  // Predicated region
  $region6: #{spr_policy_forward.1} parent=0 // pred_check
    _
  $region7: #{spr_policy_forward.1} parent=0 // pred_check_branch
    %21 = sbr.rel (0) target = $region9
  $region8: #{spr_policy_forward.1} parent=0 // pred_region
    _
  $region9: #{spr_policy_forward.1} parent=0 // pred_fallthru
    _
  // Predicated region
  $region10: #{spr_policy_forward.1} parent=0 // pred_check
    _
  $region11: #{spr_policy_forward.1} parent=0 // pred_check_branch
    %23 = sbr.rel (0) target = $region13
  $region12: #{spr_policy_forward.1} parent=0 // pred_region
    _
  $region13: #{spr_policy_forward.1} parent=0 // pred_fallthru
    _
  // Predicated region
  $region14: #{spr_policy_forward.1} parent=0 // pred_check
    _
  $region15: #{spr_policy_forward.1} parent=0 // pred_check_branch
    %25 = sbr.rel (0) target = $region17
  $region16: #{spr_policy_forward.1} parent=0 // pred_region
    _
  $region17: #{spr_policy_forward.1} parent=0 // pred_fallthru
    _
  // Predicated region
  $region18: #{spr_policy_forward.1} parent=0 // pred_check
    _
  $region19: #{spr_policy_forward.1} parent=0 // pred_check_branch
    %27 = sbr.rel (0) target = $region21
  $region20: #{spr_policy_forward.1} parent=0 // pred_region
    _
  $region21: #{spr_policy_forward.1} parent=0 // pred_fallthru
    _
  // Predicated region
  $region22: #{spr_policy_forward.1} parent=0 // pred_check
    _
  $region23: #{spr_policy_forward.1} parent=0 // pred_check_branch
    %29 = sbr.rel (0) target = $region25
  $region24: #{spr_policy_forward.1} parent=0 // pred_region
    _
  $region25: #{spr_policy_forward.1} parent=0 // pred_fallthru
    _
  // Predicated region
  $region26: #{spr_policy_forward.1} parent=0 // pred_check
    _
  $region27: #{spr_policy_forward.1} parent=0 // pred_check_branch
    %31 = sbr.rel (0) target = $region29
  $region28: #{spr_policy_forward.1} parent=0 // pred_region
    _
  $region29: #{spr_policy_forward.1} parent=0 // pred_fallthru
    _
  // Predicated region
  $region30: #{spr_policy_forward.1} parent=0 // pred_check
    _
  $region31: #{spr_policy_forward.1} parent=0 // pred_check_branch
    %33 = sbr.rel (0) target = $region33
  $region32: #{spr_policy_forward.1} parent=0 // pred_region
    _
  $region33: #{spr_policy_forward.1} parent=0 // pred_fallthru
    _
  // Predicated region
  $region34: #{spr_policy_forward.1} parent=0 // pred_check
    _
  $region35: #{spr_policy_forward.1} parent=0 // pred_check_branch
    %35 = sbr.rel (0) target = $region37
  $region36: #{spr_policy_forward.1} parent=0 // pred_region
    _
  $region37: #{spr_policy_forward.1} parent=0 // pred_fallthru
    _
  // Predicated region
  $region38: #{spr_policy_forward.1} parent=0 // pred_check
    _
  $region39: #{spr_policy_forward.1} parent=0 // pred_check_branch
    %37 = sbr.rel (0) target = $region41
  $region40: #{spr_policy_forward.1} parent=0 // pred_region
    _
  $region41: #{spr_policy_forward.1} parent=0 // pred_fallthru
    _
  // Predicated region
  $region42: #{spr_policy_forward.1} parent=0 // pred_check
    _
  $region43: #{spr_policy_forward.1} parent=0 // pred_check_branch
    %39 = sbr.rel (0) target = $region45
  $region44: #{spr_policy_forward.1} parent=0 // pred_region
    _
  $region45: #{spr_policy_forward.1} parent=0 // pred_fallthru
    _
  %v40 = vld [vmem:[%s0] sm:$0xff]
  %v41 = vld [vmem:[%s0 + $0x8] sm:$0xff]
  %v42 = vld [vmem:[%s0 + $0x10] sm:$0xff]
  %v43 = vld [vmem:[%s0 + $0x18] sm:$0xff]
  %v44 = vld [vmem:[%s0 + $0x20] sm:$0xff]
  %v45 = vld [vmem:[%s0 + $0x28] sm:$0xff]
  %v46 = vld [vmem:[%s0 + $0x30] sm:$0xff]
  %v47 = vld [vmem:[%s0 + $0x38] sm:$0xff]
  %v48 = vld [vmem:[%s0 + $0x40] sm:$0xff]
  %v49 = vld [vmem:[%s0 + $0x48] sm:$0xff]
  %v50 = vld [vmem:[%s0 + $0x50] sm:$0xff]
  %v51 = vld [vmem:[%s0 + $0x58] sm:$0xff]
  %v52 = vld [vmem:[%s0 + $0x60] sm:$0xff]
  %v53 = vld [vmem:[%s0 + $0x68] sm:$0xff]
  %v54 = vld [vmem:[%s0 + $0x70] sm:$0xff]
  %v55 = vld [vmem:[%s0 + $0x78] sm:$0xff]
  %v56 = vld [vmem:[%s0 + $0x80] sm:$0xff]
  %v57 = vld [vmem:[%s0 + $0x88] sm:$0xff]
  %v58 = vld [vmem:[%s0 + $0x90] sm:$0xff]
  %v59 = vld [vmem:[%s0 + $0x98] sm:$0xff]
  %v60 = vld [vmem:[%s0 + $0xa0] sm:$0xff]
  %v61 = vld [vmem:[%s0 + $0xa8] sm:$0xff]
  %v62 = vld [vmem:[%s0 + $0xb0] sm:$0xff]
  %v63 = vld [vmem:[%s0 + $0xb8] sm:$0xff]
  %v64 = vld [vmem:[%s0 + $0xc0] sm:$0xff]
  %v65 = vld [vmem:[%s0 + $0xc8] sm:$0xff]
  %v66 = vld [vmem:[%s0 + $0xd0] sm:$0xff]
  %v67 = vld [vmem:[%s1] sm:$0xff]
  %v68 = vld [vmem:[%s1 + $0x8] sm:$0xff]
  %v69 = vld [vmem:[%s1 + $0x10] sm:$0xff]
  %v70 = vld [vmem:[%s1 + $0x18] sm:$0xff]
  %v71 = vld [vmem:[%s1 + $0x20] sm:$0xff]
  %v72 = vld [vmem:[%s1 + $0x28] sm:$0xff]
  %v73 = vld [vmem:[%s1 + $0x30] sm:$0xff]
  %v74 = vld [vmem:[%s1 + $0x38] sm:$0xff]
  %v75 = vld [vmem:[%s1 + $0x40] sm:$0xff]
  %v76 = vld [vmem:[%s1 + $0x48] sm:$0xff]
  %v77 = vld [vmem:[%s1 + $0x50] sm:$0xff]
  %v78 = vld [vmem:[%s1 + $0x58] sm:$0xff]
  %v79 = vld [vmem:[%s1 + $0x60] sm:$0xff]
  %v80 = vld [vmem:[%s1 + $0x68] sm:$0xff]
  %v81 = vld [vmem:[%s1 + $0x70] sm:$0xff]
  %v82 = vld [vmem:[%s1 + $0x78] sm:$0xff]
  %v83 = vld [vmem:[%s1 + $0x80] sm:$0xff]
  %v84 = vld [vmem:[%s1 + $0x88] sm:$0xff]
  %v85 = vld [vmem:[%s1 + $0x90] sm:$0xff]
  %v86 = vld [vmem:[%s1 + $0x98] sm:$0xff]
  %v87 = vld [vmem:[%s1 + $0xa0] sm:$0xff]
  %v88 = vld [vmem:[%s1 + $0xa8] sm:$0xff]
  %v89 = vld [vmem:[%s1 + $0xb0] sm:$0xff]
  %v90 = vld [vmem:[%s1 + $0xb8] sm:$0xff]
  %v91 = vld [vmem:[%s1 + $0xc0] sm:$0xff]
  %v92 = vld [vmem:[%s1 + $0xc8] sm:$0xff]
  %v93 = vld [vmem:[%s1 + $0xd0] sm:$0xff]
  %v94 = vld [vmem:[%s1 + $0xd8] sm:$0xff]
  %v95 = vld [vmem:[%s1 + $0xe0] sm:$0xff]
  %v96 = vld [vmem:[%s1 + $0xe8] sm:$0xff]
  %v97 = vld [vmem:[%s1 + $0xf0] sm:$0xff]
  %v98 = vld [vmem:[%s1 + $0xf8] sm:$0xff]
  %v99 = vld [vmem:[%s1 + $0x100] sm:$0xff]
  %v100 = vld [vmem:[%s1 + $0x108] sm:$0xff]
  %v101 = vld [vmem:[%s1 + $0x110] sm:$0xff]
  %v102 = vld [vmem:[%s1 + $0x118] sm:$0xff]
  %v103 = vld [vmem:[%s1 + $0x120] sm:$0xff]
  %v104 = vld [vmem:[%s1 + $0x128] sm:$0xff]
  %v105 = vld [vmem:[%s1 + $0x130] sm:$0xff]
  %v106 = vld [vmem:[%s1 + $0x138] sm:$0xff]
  %v107 = vld [vmem:[%s1 + $0x140] sm:$0xff]
  %v108 = vld [vmem:[%s1 + $0x148] sm:$0xff]
  %v109 = vld [vmem:[%s1 + $0x150] sm:$0xff]
  %v110 = vld [vmem:[%s1 + $0x158] sm:$0xff]
  %v111 = vld [vmem:[%s1 + $0x160] sm:$0xff]
  %v112 = vld [vmem:[%s1 + $0x168] sm:$0xff]
  %v113 = vld [vmem:[%s1 + $0x170] sm:$0xff]
  %v114 = vld [vmem:[%s1 + $0x178] sm:$0xff]
  %v115 = vld [vmem:[%s1 + $0x180] sm:$0xff]
  %v116 = vld [vmem:[%s1 + $0x188] sm:$0xff]
  %v117 = vld [vmem:[%s1 + $0x190] sm:$0xff]
  %v118 = vld [vmem:[%s1 + $0x198] sm:$0xff]
  %v119 = vld [vmem:[%s1 + $0x1a0] sm:$0xff]
  %v120 = vld [vmem:[%s1 + $0x1a8] sm:$0xff]
  %v121 = vld [vmem:[%s1 + $0x1b0] sm:$0xff]
  %v122 = vld [vmem:[%s1 + $0x1b8] sm:$0xff]
  %v123 = vld [vmem:[%s1 + $0x1c0] sm:$0xff]
  %v124 = vld [vmem:[%s1 + $0x1c8] sm:$0xff]
  %v125 = vld [vmem:[%s1 + $0x1d0] sm:$0xff]
  %v126 = vld [vmem:[%s1 + $0x1d8] sm:$0xff]
  %v127 = vld [vmem:[%s1 + $0x1e0] sm:$0xff]
  %v128 = vld [vmem:[%s1 + $0x1e8] sm:$0xff]
  %v129 = vld [vmem:[%s1 + $0x1f0] sm:$0xff]
  %v130 = vld [vmem:[%s1 + $0x1f8] sm:$0xff]
  %v131 = vld [vmem:[%s1 + $0x200] sm:$0xff]
  %v132 = vld [vmem:[%s1 + $0x208] sm:$0xff]
  %v133 = vld [vmem:[%s1 + $0x210] sm:$0xff]
  %v134 = vld [vmem:[%s1 + $0x218] sm:$0xff]
  %v135 = vld [vmem:[%s1 + $0x220] sm:$0xff]
  %v136 = vld [vmem:[%s1 + $0x228] sm:$0xff]
  %v137 = vld [vmem:[%s1 + $0x230] sm:$0xff]
  %v138 = vld [vmem:[%s1 + $0x238] sm:$0xff]
  %v139 = vld [vmem:[%s1 + $0x240] sm:$0xff]
  %v140 = vld [vmem:[%s1 + $0x248] sm:$0xff]
  %v141 = vld [vmem:[%s1 + $0x250] sm:$0xff]
  %v142 = vld [vmem:[%s1 + $0x258] sm:$0xff]
  %v143 = vld [vmem:[%s1 + $0x260] sm:$0xff]
  %v144 = vld [vmem:[%s1 + $0x268] sm:$0xff]
  %v145 = vld [vmem:[%s1 + $0x270] sm:$0xff]
  %v146 = vld [vmem:[%s1 + $0x278] sm:$0xff]
  %v147 = vld [vmem:[%s1 + $0x280] sm:$0xf]
  %v148 = vld [vmem:[%s1 + $0x288] sm:$0xf]
  %v149 = vld [vmem:[%s2] sm:$0x3]
  %v151 = vperm.slane %v149, 0
  %v152 = vperm.slane %v149, 1
  %vm155 = vcmask 556032
  %v157 = vsel %vm155, %v42, 0
  %v160 = vsel %vm155, %v45, 0
  %v163 = vsel %vm155, %v48, 0
  %v166 = vsel %vm155, %v51, 0
  %v169 = vsel %vm155, %v54, 0
  %v172 = vsel %vm155, %v57, 0
  %v175 = vsel %vm155, %v60, 0
  %v178 = vsel %vm155, %v63, 0
  %v181 = vsel %vm155, %v66, 0
  %vm183 = vcmask 1043456
  %v185 = vsel %vm183, %v147, 0
  %v188 = vsel %vm183, %v148, 0
  %190 = vmatpush.msra.mxu0 %v97
  %191 = vmatpush.msra.mxu0 %v95
  %192 = vmatpush.msra.mxu0 %v93
  %193 = vmatpush.msra.mxu0 %v91
  %194 = vmatpush.msra.mxu0 %v89
  %195 = vmatpush.msra.mxu0 %v87
  %196 = vmatpush.msra.mxu0 %v85
  %197 = vmatpush.msra.mxu0 %v83
  %198 = vmatpush.msra.mxu0 %v81
  %199 = vmatpush.msra.mxu0 %v79
  %200 = vmatpush.msra.mxu0 %v77
  %201 = vmatpush.msra.mxu0 %v75
  %202 = vmatpush.msra.mxu0 %v73
  %203 = vmatpush.msra.mxu0 %v71
  %204 = vmatpush.msra.mxu0 %v69
  %205 = vmatpush.msra.mxu0 %v67
  %206 = vmatmul.f32.gmra.mxu0 %v40
  %v207 = vpop.f32.mrf.mxu0
  %v208 = vadd.f32 %v151, %v207
  %209 = vmatmul.f32.gmra.mxu0 %v43
  %v210 = vpop.f32.mrf.mxu0
  %v211 = vadd.f32 %v151, %v210
  %212 = vmatmul.f32.gmra.mxu0 %v46
  %v213 = vpop.f32.mrf.mxu0
  %v214 = vadd.f32 %v151, %v213
  %215 = vmatmul.f32.gmra.mxu0 %v49
  %v216 = vpop.f32.mrf.mxu0
  %v217 = vadd.f32 %v151, %v216
  %218 = vmatmul.f32.gmra.mxu0 %v52
  %v219 = vpop.f32.mrf.mxu0
  %v220 = vadd.f32 %v151, %v219
  %221 = vmatmul.f32.gmra.mxu0 %v55
  %v222 = vpop.f32.mrf.mxu0
  %v223 = vadd.f32 %v151, %v222
  %224 = vmatmul.f32.gmra.mxu0 %v58
  %v225 = vpop.f32.mrf.mxu0
  %v226 = vadd.f32 %v151, %v225
  %227 = vmatmul.f32.gmra.mxu0 %v61
  %v228 = vpop.f32.mrf.mxu0
  %v229 = vadd.f32 %v151, %v228
  %230 = vmatmul.f32.gmra.mxu0 %v64
  %v231 = vpop.f32.mrf.mxu0
  %v232 = vadd.f32 %v151, %v231
  %233 = vdwg.mxu0
  %234 = vmatpush.msra.mxu0 %v129
  %235 = vmatpush.msra.mxu0 %v127
  %236 = vmatpush.msra.mxu0 %v125
  %237 = vmatpush.msra.mxu0 %v123
  %238 = vmatpush.msra.mxu0 %v121
  %239 = vmatpush.msra.mxu0 %v119
  %240 = vmatpush.msra.mxu0 %v117
  %241 = vmatpush.msra.mxu0 %v115
  %242 = vmatpush.msra.mxu0 %v113
  %243 = vmatpush.msra.mxu0 %v111
  %244 = vmatpush.msra.mxu0 %v109
  %245 = vmatpush.msra.mxu0 %v107
  %246 = vmatpush.msra.mxu0 %v105
  %247 = vmatpush.msra.mxu0 %v103
  %248 = vmatpush.msra.mxu0 %v101
  %249 = vmatpush.msra.mxu0 %v99
  %250 = vmatmul.f32.gmra.mxu0 %v41
  %v251 = vpop.f32.mrf.mxu0
  %v252 = vadd.f32 %v208, %v251
  %253 = vmatmul.f32.gmra.mxu0 %v44
  %v254 = vpop.f32.mrf.mxu0
  %v255 = vadd.f32 %v211, %v254
  %256 = vmatmul.f32.gmra.mxu0 %v47
  %v257 = vpop.f32.mrf.mxu0
  %v258 = vadd.f32 %v214, %v257
  %259 = vmatmul.f32.gmra.mxu0 %v50
  %v260 = vpop.f32.mrf.mxu0
  %v261 = vadd.f32 %v217, %v260
  %262 = vmatmul.f32.gmra.mxu0 %v53
  %v263 = vpop.f32.mrf.mxu0
  %v264 = vadd.f32 %v220, %v263
  %265 = vmatmul.f32.gmra.mxu0 %v56
  %v266 = vpop.f32.mrf.mxu0
  %v267 = vadd.f32 %v223, %v266
  %268 = vmatmul.f32.gmra.mxu0 %v59
  %v269 = vpop.f32.mrf.mxu0
  %v270 = vadd.f32 %v226, %v269
  %271 = vmatmul.f32.gmra.mxu0 %v62
  %v272 = vpop.f32.mrf.mxu0
  %v273 = vadd.f32 %v229, %v272
  %274 = vmatmul.f32.gmra.mxu0 %v65
  %v275 = vpop.f32.mrf.mxu0
  %v276 = vadd.f32 %v232, %v275
  %277 = vdwg.mxu0
  %278 = vmatpush.msra.mxu0 0.0
  %279 = vmatpush.msra.mxu0 0.0
  %280 = vmatpush.msra.mxu0 0.0
  %281 = vmatpush.msra.mxu0 0.0
  %282 = vmatpush.msra.mxu0 0.0
  %283 = vmatpush.msra.mxu0 0.0
  %284 = vmatpush.msra.mxu0 0.0
  %285 = vmatpush.msra.mxu0 %v185
  %286 = vmatpush.msra.mxu0 %v145
  %287 = vmatpush.msra.mxu0 %v143
  %288 = vmatpush.msra.mxu0 %v141
  %289 = vmatpush.msra.mxu0 %v139
  %290 = vmatpush.msra.mxu0 %v137
  %291 = vmatpush.msra.mxu0 %v135
  %292 = vmatpush.msra.mxu0 %v133
  %293 = vmatpush.msra.mxu0 %v131
  %294 = vmatmul.f32.gmra.mxu0 %v157
  %v295 = vpop.f32.mrf.mxu0
  %v296 = vadd.f32 %v252, %v295
  %297 = vmatmul.f32.gmra.mxu0 %v160
  %v298 = vpop.f32.mrf.mxu0
  %v299 = vadd.f32 %v255, %v298
  %300 = vmatmul.f32.gmra.mxu0 %v163
  %v301 = vpop.f32.mrf.mxu0
  %v302 = vadd.f32 %v258, %v301
  %303 = vmatmul.f32.gmra.mxu0 %v166
  %v304 = vpop.f32.mrf.mxu0
  %v305 = vadd.f32 %v261, %v304
  %306 = vmatmul.f32.gmra.mxu0 %v169
  %v307 = vpop.f32.mrf.mxu0
  %v308 = vadd.f32 %v264, %v307
  %309 = vmatmul.f32.gmra.mxu0 %v172
  %v310 = vpop.f32.mrf.mxu0
  %v311 = vadd.f32 %v267, %v310
  %312 = vmatmul.f32.gmra.mxu0 %v175
  %v313 = vpop.f32.mrf.mxu0
  %v314 = vadd.f32 %v270, %v313
  %315 = vmatmul.f32.gmra.mxu0 %v178
  %v316 = vpop.f32.mrf.mxu0
  %v317 = vadd.f32 %v273, %v316
  %318 = vmatmul.f32.gmra.mxu0 %v181
  %v319 = vpop.f32.mrf.mxu0
  %v320 = vadd.f32 %v276, %v319
  %321 = vdwg.mxu0
  %322 = vmatpush.msra.mxu0 %v98
  %323 = vmatpush.msra.mxu0 %v96
  %324 = vmatpush.msra.mxu0 %v94
  %325 = vmatpush.msra.mxu0 %v92
  %326 = vmatpush.msra.mxu0 %v90
  %327 = vmatpush.msra.mxu0 %v88
  %328 = vmatpush.msra.mxu0 %v86
  %329 = vmatpush.msra.mxu0 %v84
  %330 = vmatpush.msra.mxu0 %v82
  %331 = vmatpush.msra.mxu0 %v80
  %332 = vmatpush.msra.mxu0 %v78
  %333 = vmatpush.msra.mxu0 %v76
  %334 = vmatpush.msra.mxu0 %v74
  %335 = vmatpush.msra.mxu0 %v72
  %336 = vmatpush.msra.mxu0 %v70
  %337 = vmatpush.msra.mxu0 %v68
  %338 = vmatmul.f32.gmra.mxu0 %v40
  %v339 = vpop.f32.mrf.mxu0
  %v340 = vadd.f32 %v152, %v339
  %341 = vmatmul.f32.gmra.mxu0 %v43
  %v342 = vpop.f32.mrf.mxu0
  %v343 = vadd.f32 %v152, %v342
  %344 = vmatmul.f32.gmra.mxu0 %v46
  %v345 = vpop.f32.mrf.mxu0
  %v346 = vadd.f32 %v152, %v345
  %347 = vmatmul.f32.gmra.mxu0 %v49
  %v348 = vpop.f32.mrf.mxu0
  %v349 = vadd.f32 %v152, %v348
  %350 = vmatmul.f32.gmra.mxu0 %v52
  %v351 = vpop.f32.mrf.mxu0
  %v352 = vadd.f32 %v152, %v351
  %353 = vmatmul.f32.gmra.mxu0 %v55
  %v354 = vpop.f32.mrf.mxu0
  %v355 = vadd.f32 %v152, %v354
  %356 = vmatmul.f32.gmra.mxu0 %v58
  %v357 = vpop.f32.mrf.mxu0
  %v358 = vadd.f32 %v152, %v357
  %359 = vmatmul.f32.gmra.mxu0 %v61
  %v360 = vpop.f32.mrf.mxu0
  %v361 = vadd.f32 %v152, %v360
  %362 = vmatmul.f32.gmra.mxu0 %v64
  %v363 = vpop.f32.mrf.mxu0
  %v364 = vadd.f32 %v152, %v363
  %365 = vdwg.mxu0
  %366 = vmatpush.msra.mxu0 %v130
  %367 = vmatpush.msra.mxu0 %v128
  %368 = vmatpush.msra.mxu0 %v126
  %369 = vmatpush.msra.mxu0 %v124
  %370 = vmatpush.msra.mxu0 %v122
  %371 = vmatpush.msra.mxu0 %v120
  %372 = vmatpush.msra.mxu0 %v118
  %373 = vmatpush.msra.mxu0 %v116
  %374 = vmatpush.msra.mxu0 %v114
  %375 = vmatpush.msra.mxu0 %v112
  %376 = vmatpush.msra.mxu0 %v110
  %377 = vmatpush.msra.mxu0 %v108
  %378 = vmatpush.msra.mxu0 %v106
  %379 = vmatpush.msra.mxu0 %v104
  %380 = vmatpush.msra.mxu0 %v102
  %381 = vmatpush.msra.mxu0 %v100
  %382 = vmatmul.f32.gmra.mxu0 %v41
  %v383 = vpop.f32.mrf.mxu0
  %v384 = vadd.f32 %v340, %v383
  %385 = vmatmul.f32.gmra.mxu0 %v44
  %v386 = vpop.f32.mrf.mxu0
  %v387 = vadd.f32 %v343, %v386
  %388 = vmatmul.f32.gmra.mxu0 %v47
  %v389 = vpop.f32.mrf.mxu0
  %v390 = vadd.f32 %v346, %v389
  %391 = vmatmul.f32.gmra.mxu0 %v50
  %v392 = vpop.f32.mrf.mxu0
  %v393 = vadd.f32 %v349, %v392
  %394 = vmatmul.f32.gmra.mxu0 %v53
  %v395 = vpop.f32.mrf.mxu0
  %v396 = vadd.f32 %v352, %v395
  %397 = vmatmul.f32.gmra.mxu0 %v56
  %v398 = vpop.f32.mrf.mxu0
  %v399 = vadd.f32 %v355, %v398
  %400 = vmatmul.f32.gmra.mxu0 %v59
  %v401 = vpop.f32.mrf.mxu0
  %v402 = vadd.f32 %v358, %v401
  %403 = vmatmul.f32.gmra.mxu0 %v62
  %v404 = vpop.f32.mrf.mxu0
  %v405 = vadd.f32 %v361, %v404
  %406 = vmatmul.f32.gmra.mxu0 %v65
  %v407 = vpop.f32.mrf.mxu0
  %v408 = vadd.f32 %v364, %v407
  %409 = vdwg.mxu0
  %410 = vmatpush.msra.mxu0 0.0
  %411 = vmatpush.msra.mxu0 0.0
  %412 = vmatpush.msra.mxu0 0.0
  %413 = vmatpush.msra.mxu0 0.0
  %414 = vmatpush.msra.mxu0 0.0
  %415 = vmatpush.msra.mxu0 0.0
  %416 = vmatpush.msra.mxu0 0.0
  %417 = vmatpush.msra.mxu0 %v188
  %418 = vmatpush.msra.mxu0 %v146
  %419 = vmatpush.msra.mxu0 %v144
  %420 = vmatpush.msra.mxu0 %v142
  %421 = vmatpush.msra.mxu0 %v140
  %422 = vmatpush.msra.mxu0 %v138
  %423 = vmatpush.msra.mxu0 %v136
  %424 = vmatpush.msra.mxu0 %v134
  %425 = vmatpush.msra.mxu0 %v132
  %426 = vmatmul.f32.gmra.mxu0 %v157
  %v427 = vpop.f32.mrf.mxu0
  %v428 = vadd.f32 %v384, %v427
  %429 = vmatmul.f32.gmra.mxu0 %v160
  %v430 = vpop.f32.mrf.mxu0
  %v431 = vadd.f32 %v387, %v430
  %432 = vmatmul.f32.gmra.mxu0 %v163
  %v433 = vpop.f32.mrf.mxu0
  %v434 = vadd.f32 %v390, %v433
  %435 = vmatmul.f32.gmra.mxu0 %v166
  %v436 = vpop.f32.mrf.mxu0
  %v437 = vadd.f32 %v393, %v436
  %438 = vmatmul.f32.gmra.mxu0 %v169
  %v439 = vpop.f32.mrf.mxu0
  %v440 = vadd.f32 %v396, %v439
  %441 = vmatmul.f32.gmra.mxu0 %v172
  %v442 = vpop.f32.mrf.mxu0
  %v443 = vadd.f32 %v399, %v442
  %444 = vmatmul.f32.gmra.mxu0 %v175
  %v445 = vpop.f32.mrf.mxu0
  %v446 = vadd.f32 %v402, %v445
  %447 = vmatmul.f32.gmra.mxu0 %v178
  %v448 = vpop.f32.mrf.mxu0
  %v449 = vadd.f32 %v405, %v448
  %450 = vmatmul.f32.gmra.mxu0 %v181
  %v451 = vpop.f32.mrf.mxu0
  %v452 = vadd.f32 %v408, %v451
  %453 = vdwg.mxu0
  %v454 = vmax.f32 %v296, 0.0
  %v455 = vmax.f32 %v428, 0.0
  %v456 = vmax.f32 %v299, 0.0
  %v457 = vmax.f32 %v431, 0.0
  %v458 = vmax.f32 %v302, 0.0
  %v459 = vmax.f32 %v434, 0.0
  %v460 = vmax.f32 %v305, 0.0
  %v461 = vmax.f32 %v437, 0.0
  %v462 = vmax.f32 %v308, 0.0
  %v463 = vmax.f32 %v440, 0.0
  %v464 = vmax.f32 %v311, 0.0
  %v465 = vmax.f32 %v443, 0.0
  %v466 = vmax.f32 %v314, 0.0
  %v467 = vmax.f32 %v446, 0.0
  %v468 = vmax.f32 %v317, 0.0
  %v469 = vmax.f32 %v449, 0.0
  %v470 = vmax.f32 %v320, 0.0
  %v471 = vmax.f32 %v452, 0.0
  %v472 = vld [vmem:[%s3] sm:$0xff]
  %v473 = vld [vmem:[%s3 + $0x8] sm:$0xff]
  %v474 = vld [vmem:[%s3 + $0x10] sm:$0xff]
  %v475 = vld [vmem:[%s3 + $0x18] sm:$0xff]
  %v476 = vld [vmem:[%s3 + $0x20] sm:$0xff]
  %v477 = vld [vmem:[%s3 + $0x28] sm:$0xff]
  %v478 = vld [vmem:[%s3 + $0x30] sm:$0xff]
  %v479 = vld [vmem:[%s3 + $0x38] sm:$0xff]
  %v480 = vld [vmem:[%s3 + $0x40] sm:$0xff]
  %v481 = vld [vmem:[%s3 + $0x48] sm:$0xff]
  %v482 = vld [vmem:[%s3 + $0x50] sm:$0xff]
  %v483 = vld [vmem:[%s3 + $0x58] sm:$0xff]
  %v484 = vld [vmem:[%s3 + $0x60] sm:$0xff]
  %v485 = vld [vmem:[%s3 + $0x68] sm:$0xff]
  %v486 = vld [vmem:[%s3 + $0x70] sm:$0xff]
  %v487 = vld [vmem:[%s3 + $0x78] sm:$0xff]
  %v488 = vld [vmem:[%s3 + $0x80] sm:$0xff]
  %v489 = vld [vmem:[%s3 + $0x88] sm:$0xff]
  %v490 = vld [vmem:[%s4] sm:$0x1]
  %v492 = vperm.slane %v490, 0
  %vm494 = vcmask 130048
  %v496 = vsel %vm494, %v455, 0
  %v499 = vsel %vm494, %v457, 0
  %v502 = vsel %vm494, %v459, 0
  %v505 = vsel %vm494, %v461, 0
  %v508 = vsel %vm494, %v463, 0
  %v511 = vsel %vm494, %v465, 0
  %v514 = vsel %vm494, %v467, 0
  %v517 = vsel %vm494, %v469, 0
  %v520 = vsel %vm494, %v471, 0
  %522 = vmatpush.msra.mxu0 %v487
  %523 = vmatpush.msra.mxu0 %v486
  %524 = vmatpush.msra.mxu0 %v485
  %525 = vmatpush.msra.mxu0 %v484
  %526 = vmatpush.msra.mxu0 %v483
  %527 = vmatpush.msra.mxu0 %v482
  %528 = vmatpush.msra.mxu0 %v481
  %529 = vmatpush.msra.mxu0 %v480
  %530 = vmatpush.msra.mxu0 %v479
  %531 = vmatpush.msra.mxu0 %v478
  %532 = vmatpush.msra.mxu0 %v477
  %533 = vmatpush.msra.mxu0 %v476
  %534 = vmatpush.msra.mxu0 %v475
  %535 = vmatpush.msra.mxu0 %v474
  %536 = vmatpush.msra.mxu0 %v473
  %537 = vmatpush.msra.mxu0 %v472
  %538 = vmatmul.f32.gmra.mxu0 %v454
  %v539 = vpop.f32.mrf.mxu0
  %v540 = vadd.f32 %v492, %v539
  %541 = vmatmul.f32.gmra.mxu0 %v456
  %v542 = vpop.f32.mrf.mxu0
  %v543 = vadd.f32 %v492, %v542
  %544 = vmatmul.f32.gmra.mxu0 %v458
  %v545 = vpop.f32.mrf.mxu0
  %v546 = vadd.f32 %v492, %v545
  %547 = vmatmul.f32.gmra.mxu0 %v460
  %v548 = vpop.f32.mrf.mxu0
  %v549 = vadd.f32 %v492, %v548
  %550 = vmatmul.f32.gmra.mxu0 %v462
  %v551 = vpop.f32.mrf.mxu0
  %v552 = vadd.f32 %v492, %v551
  %553 = vmatmul.f32.gmra.mxu0 %v464
  %v554 = vpop.f32.mrf.mxu0
  %v555 = vadd.f32 %v492, %v554
  %556 = vmatmul.f32.gmra.mxu0 %v466
  %v557 = vpop.f32.mrf.mxu0
  %v558 = vadd.f32 %v492, %v557
  %559 = vmatmul.f32.gmra.mxu0 %v468
  %v560 = vpop.f32.mrf.mxu0
  %v561 = vadd.f32 %v492, %v560
  %562 = vmatmul.f32.gmra.mxu0 %v470
  %v563 = vpop.f32.mrf.mxu0
  %v564 = vadd.f32 %v492, %v563
  %565 = vdwg.mxu0
  %566 = vmatpush.msra.mxu0 0.0
  %567 = vmatpush.msra.mxu0 0.0
  %568 = vmatpush.msra.mxu0 0.0
  %569 = vmatpush.msra.mxu0 0.0
  %570 = vmatpush.msra.mxu0 0.0
  %571 = vmatpush.msra.mxu0 0.0
  %572 = vmatpush.msra.mxu0 0.0
  %573 = vmatpush.msra.mxu0 0.0
  %574 = vmatpush.msra.mxu0 0.0
  %575 = vmatpush.msra.mxu0 0.0
  %576 = vmatpush.msra.mxu0 0.0
  %577 = vmatpush.msra.mxu0 0.0
  %578 = vmatpush.msra.mxu0 0.0
  %579 = vmatpush.msra.mxu0 0.0
  %580 = vmatpush.msra.mxu0 %v489
  %581 = vmatpush.msra.mxu0 %v488
  %582 = vmatmul.f32.gmra.mxu0 %v496
  %v583 = vpop.f32.mrf.mxu0
  %v584 = vadd.f32 %v540, %v583
  %585 = vmatmul.f32.gmra.mxu0 %v499
  %v586 = vpop.f32.mrf.mxu0
  %v587 = vadd.f32 %v543, %v586
  %588 = vmatmul.f32.gmra.mxu0 %v502
  %v589 = vpop.f32.mrf.mxu0
  %v590 = vadd.f32 %v546, %v589
  %591 = vmatmul.f32.gmra.mxu0 %v505
  %v592 = vpop.f32.mrf.mxu0
  %v593 = vadd.f32 %v549, %v592
  %594 = vmatmul.f32.gmra.mxu0 %v508
  %v595 = vpop.f32.mrf.mxu0
  %v596 = vadd.f32 %v552, %v595
  %597 = vmatmul.f32.gmra.mxu0 %v511
  %v598 = vpop.f32.mrf.mxu0
  %v599 = vadd.f32 %v555, %v598
  %600 = vmatmul.f32.gmra.mxu0 %v514
  %v601 = vpop.f32.mrf.mxu0
  %v602 = vadd.f32 %v558, %v601
  %603 = vmatmul.f32.gmra.mxu0 %v517
  %v604 = vpop.f32.mrf.mxu0
  %v605 = vadd.f32 %v561, %v604
  %606 = vmatmul.f32.gmra.mxu0 %v520
  %v607 = vpop.f32.mrf.mxu0
  %v608 = vadd.f32 %v564, %v607
  %609 = vdwg.mxu0
  %v610 = vmax.f32 %v584, 0.0
  %v611 = vmax.f32 %v587, 0.0
  %v612 = vmax.f32 %v590, 0.0
  %v613 = vmax.f32 %v593, 0.0
  %v614 = vmax.f32 %v596, 0.0
  %v615 = vmax.f32 %v599, 0.0
  %v616 = vmax.f32 %v602, 0.0
  %v617 = vmax.f32 %v605, 0.0
  %v618 = vmax.f32 %v608, 0.0
  %v619 = vld [vmem:[%s5] sm:$0xff]
  %v620 = vld [vmem:[%s5 + $0x8] sm:$0xff]
  %v621 = vld [vmem:[%s5 + $0x10] sm:$0xff]
  %v622 = vld [vmem:[%s5 + $0x18] sm:$0xff]
  %s623 = scalar_lea.vmem %s5, 32
  %v624 = vld [vmem:[%s623] sm:$0xff]
  %v625 = vld [vmem:[%s623 + $0x8] sm:$0xff]
  %v626 = vld [vmem:[%s623 + $0x10] sm:$0xff]
  %v627 = vld [vmem:[%s623 + $0x18] sm:$0xff]
  %vm628 = vcmask 261120
  %v630 = vsel %vm628, %v611, 0
  %632 = vmatpush.msra.mxu0 0.0
  %633 = vmatpush.msra.mxu0 0.0
  %634 = vmatpush.msra.mxu0 0.0
  %635 = vmatpush.msra.mxu0 0.0
  %636 = vmatpush.msra.mxu0 0.0
  %637 = vmatpush.msra.mxu0 0.0
  %638 = vmatpush.msra.mxu0 0.0
  %639 = vmatpush.msra.mxu0 0.0
  %640 = vmatpush.msra.mxu0 0.0
  %641 = vmatpush.msra.mxu0 0.0
  %642 = vmatpush.msra.mxu0 0.0
  %643 = vmatpush.msra.mxu0 0.0
  %644 = vmatpush.msra.mxu0 %v627
  %645 = vmatpush.msra.mxu0 %v626
  %646 = vmatpush.msra.mxu0 %v625
  %647 = vmatpush.msra.mxu0 %v624
  %648 = vmatmul.f32.gmra.mxu0 %v630
  %v649 = vpop.f32.mrf.mxu0
  %v650 = vadd.f32 0.0, %v649
  %651 = vdwg.mxu0
  %v653 = vsel %vm628, %v610, 0
  %655 = vmatpush.msra.mxu0 0.0
  %656 = vmatpush.msra.mxu0 0.0
  %657 = vmatpush.msra.mxu0 0.0
  %658 = vmatpush.msra.mxu0 0.0
  %659 = vmatpush.msra.mxu0 0.0
  %660 = vmatpush.msra.mxu0 0.0
  %661 = vmatpush.msra.mxu0 0.0
  %662 = vmatpush.msra.mxu0 0.0
  %663 = vmatpush.msra.mxu0 0.0
  %664 = vmatpush.msra.mxu0 0.0
  %665 = vmatpush.msra.mxu0 0.0
  %666 = vmatpush.msra.mxu0 0.0
  %667 = vmatpush.msra.mxu0 %v622
  %668 = vmatpush.msra.mxu0 %v621
  %669 = vmatpush.msra.mxu0 %v620
  %670 = vmatpush.msra.mxu0 %v619
  %671 = vmatmul.f32.gmra.mxu0 %v653
  %v672 = vpop.f32.mrf.mxu0
  %v673 = vadd.f32 %v650, %v672
  %674 = vdwg.mxu0
  %s675 = scalar_lea.vmem %s5, 64
  %v676 = vld [vmem:[%s675] sm:$0xff]
  %v677 = vld [vmem:[%s675 + $0x8] sm:$0xff]
  %v678 = vld [vmem:[%s675 + $0x10] sm:$0xff]
  %v679 = vld [vmem:[%s675 + $0x18] sm:$0xff]
  %v681 = vsel %vm628, %v612, 0
  %683 = vmatpush.msra.mxu0 0.0
  %684 = vmatpush.msra.mxu0 0.0
  %685 = vmatpush.msra.mxu0 0.0
  %686 = vmatpush.msra.mxu0 0.0
  %687 = vmatpush.msra.mxu0 0.0
  %688 = vmatpush.msra.mxu0 0.0
  %689 = vmatpush.msra.mxu0 0.0
  %690 = vmatpush.msra.mxu0 0.0
  %691 = vmatpush.msra.mxu0 0.0
  %692 = vmatpush.msra.mxu0 0.0
  %693 = vmatpush.msra.mxu0 0.0
  %694 = vmatpush.msra.mxu0 0.0
  %695 = vmatpush.msra.mxu0 %v679
  %696 = vmatpush.msra.mxu0 %v678
  %697 = vmatpush.msra.mxu0 %v677
  %698 = vmatpush.msra.mxu0 %v676
  %699 = vmatmul.f32.gmra.mxu0 %v681
  %v700 = vpop.f32.mrf.mxu0
  %v701 = vadd.f32 0.0, %v700
  %702 = vdwg.mxu0
  %v703 = vadd.f32 %v673, %v701
  %s704 = scalar_lea.vmem %s5, 96
  %v705 = vld [vmem:[%s704] sm:$0xff]
  %v706 = vld [vmem:[%s704 + $0x8] sm:$0xff]
  %v707 = vld [vmem:[%s704 + $0x10] sm:$0xff]
  %v708 = vld [vmem:[%s704 + $0x18] sm:$0xff]
  %v710 = vsel %vm628, %v613, 0
  %712 = vmatpush.msra.mxu0 0.0
  %713 = vmatpush.msra.mxu0 0.0
  %714 = vmatpush.msra.mxu0 0.0
  %715 = vmatpush.msra.mxu0 0.0
  %716 = vmatpush.msra.mxu0 0.0
  %717 = vmatpush.msra.mxu0 0.0
  %718 = vmatpush.msra.mxu0 0.0
  %719 = vmatpush.msra.mxu0 0.0
  %720 = vmatpush.msra.mxu0 0.0
  %721 = vmatpush.msra.mxu0 0.0
  %722 = vmatpush.msra.mxu0 0.0
  %723 = vmatpush.msra.mxu0 0.0
  %724 = vmatpush.msra.mxu0 %v708
  %725 = vmatpush.msra.mxu0 %v707
  %726 = vmatpush.msra.mxu0 %v706
  %727 = vmatpush.msra.mxu0 %v705
  %728 = vmatmul.f32.gmra.mxu0 %v710
  %v729 = vpop.f32.mrf.mxu0
  %v730 = vadd.f32 0.0, %v729
  %731 = vdwg.mxu0
  %v732 = vadd.f32 %v703, %v730
  %s733 = scalar_lea.vmem %s5, 128
  %v734 = vld [vmem:[%s733] sm:$0xff]
  %v735 = vld [vmem:[%s733 + $0x8] sm:$0xff]
  %v736 = vld [vmem:[%s733 + $0x10] sm:$0xff]
  %v737 = vld [vmem:[%s733 + $0x18] sm:$0xff]
  %v739 = vsel %vm628, %v614, 0
  %741 = vmatpush.msra.mxu0 0.0
  %742 = vmatpush.msra.mxu0 0.0
  %743 = vmatpush.msra.mxu0 0.0
  %744 = vmatpush.msra.mxu0 0.0
  %745 = vmatpush.msra.mxu0 0.0
  %746 = vmatpush.msra.mxu0 0.0
  %747 = vmatpush.msra.mxu0 0.0
  %748 = vmatpush.msra.mxu0 0.0
  %749 = vmatpush.msra.mxu0 0.0
  %750 = vmatpush.msra.mxu0 0.0
  %751 = vmatpush.msra.mxu0 0.0
  %752 = vmatpush.msra.mxu0 0.0
  %753 = vmatpush.msra.mxu0 %v737
  %754 = vmatpush.msra.mxu0 %v736
  %755 = vmatpush.msra.mxu0 %v735
  %756 = vmatpush.msra.mxu0 %v734
  %757 = vmatmul.f32.gmra.mxu0 %v739
  %v758 = vpop.f32.mrf.mxu0
  %v759 = vadd.f32 0.0, %v758
  %760 = vdwg.mxu0
  %v761 = vadd.f32 %v732, %v759
  %s762 = scalar_lea.vmem %s5, 160
  %v763 = vld [vmem:[%s762] sm:$0xff]
  %v764 = vld [vmem:[%s762 + $0x8] sm:$0xff]
  %v765 = vld [vmem:[%s762 + $0x10] sm:$0xff]
  %v766 = vld [vmem:[%s762 + $0x18] sm:$0xff]
  %v768 = vsel %vm628, %v615, 0
  %770 = vmatpush.msra.mxu0 0.0
  %771 = vmatpush.msra.mxu0 0.0
  %772 = vmatpush.msra.mxu0 0.0
  %773 = vmatpush.msra.mxu0 0.0
  %774 = vmatpush.msra.mxu0 0.0
  %775 = vmatpush.msra.mxu0 0.0
  %776 = vmatpush.msra.mxu0 0.0
  %777 = vmatpush.msra.mxu0 0.0
  %778 = vmatpush.msra.mxu0 0.0
  %779 = vmatpush.msra.mxu0 0.0
  %780 = vmatpush.msra.mxu0 0.0
  %781 = vmatpush.msra.mxu0 0.0
  %782 = vmatpush.msra.mxu0 %v766
  %783 = vmatpush.msra.mxu0 %v765
  %784 = vmatpush.msra.mxu0 %v764
  %785 = vmatpush.msra.mxu0 %v763
  %786 = vmatmul.f32.gmra.mxu0 %v768
  %v787 = vpop.f32.mrf.mxu0
  %v788 = vadd.f32 0.0, %v787
  %789 = vdwg.mxu0
  %v790 = vadd.f32 %v761, %v788
  %s791 = scalar_lea.vmem %s5, 192
  %v792 = vld [vmem:[%s791] sm:$0xff]
  %v793 = vld [vmem:[%s791 + $0x8] sm:$0xff]
  %v794 = vld [vmem:[%s791 + $0x10] sm:$0xff]
  %v795 = vld [vmem:[%s791 + $0x18] sm:$0xff]
  %v797 = vsel %vm628, %v616, 0
  %799 = vmatpush.msra.mxu0 0.0
  %800 = vmatpush.msra.mxu0 0.0
  %801 = vmatpush.msra.mxu0 0.0
  %802 = vmatpush.msra.mxu0 0.0
  %803 = vmatpush.msra.mxu0 0.0
  %804 = vmatpush.msra.mxu0 0.0
  %805 = vmatpush.msra.mxu0 0.0
  %806 = vmatpush.msra.mxu0 0.0
  %807 = vmatpush.msra.mxu0 0.0
  %808 = vmatpush.msra.mxu0 0.0
  %809 = vmatpush.msra.mxu0 0.0
  %810 = vmatpush.msra.mxu0 0.0
  %811 = vmatpush.msra.mxu0 %v795
  %812 = vmatpush.msra.mxu0 %v794
  %813 = vmatpush.msra.mxu0 %v793
  %814 = vmatpush.msra.mxu0 %v792
  %815 = vmatmul.f32.gmra.mxu0 %v797
  %v816 = vpop.f32.mrf.mxu0
  %v817 = vadd.f32 0.0, %v816
  %818 = vdwg.mxu0
  %v819 = vadd.f32 %v790, %v817
  %s820 = scalar_lea.vmem %s5, 224
  %v821 = vld [vmem:[%s820] sm:$0xff]
  %v822 = vld [vmem:[%s820 + $0x8] sm:$0xff]
  %v823 = vld [vmem:[%s820 + $0x10] sm:$0xff]
  %v824 = vld [vmem:[%s820 + $0x18] sm:$0xff]
  %v826 = vsel %vm628, %v617, 0
  %828 = vmatpush.msra.mxu0 0.0
  %829 = vmatpush.msra.mxu0 0.0
  %830 = vmatpush.msra.mxu0 0.0
  %831 = vmatpush.msra.mxu0 0.0
  %832 = vmatpush.msra.mxu0 0.0
  %833 = vmatpush.msra.mxu0 0.0
  %834 = vmatpush.msra.mxu0 0.0
  %835 = vmatpush.msra.mxu0 0.0
  %836 = vmatpush.msra.mxu0 0.0
  %837 = vmatpush.msra.mxu0 0.0
  %838 = vmatpush.msra.mxu0 0.0
  %839 = vmatpush.msra.mxu0 0.0
  %840 = vmatpush.msra.mxu0 %v824
  %841 = vmatpush.msra.mxu0 %v823
  %842 = vmatpush.msra.mxu0 %v822
  %843 = vmatpush.msra.mxu0 %v821
  %844 = vmatmul.f32.gmra.mxu0 %v826
  %v845 = vpop.f32.mrf.mxu0
  %v846 = vadd.f32 0.0, %v845
  %847 = vdwg.mxu0
  %v848 = vadd.f32 %v819, %v846
  %s849 = scalar_lea.vmem %s5, 256
  %v850 = vld [vmem:[%s849] sm:$0xff]
  %v851 = vld [vmem:[%s849 + $0x8] sm:$0xff]
  %v852 = vld [vmem:[%s849 + $0x10] sm:$0xff]
  %v853 = vld [vmem:[%s849 + $0x18] sm:$0xff]
  %v855 = vsel %vm628, %v618, 0
  %857 = vmatpush.msra.mxu0 0.0
  %858 = vmatpush.msra.mxu0 0.0
  %859 = vmatpush.msra.mxu0 0.0
  %860 = vmatpush.msra.mxu0 0.0
  %861 = vmatpush.msra.mxu0 0.0
  %862 = vmatpush.msra.mxu0 0.0
  %863 = vmatpush.msra.mxu0 0.0
  %864 = vmatpush.msra.mxu0 0.0
  %865 = vmatpush.msra.mxu0 0.0
  %866 = vmatpush.msra.mxu0 0.0
  %867 = vmatpush.msra.mxu0 0.0
  %868 = vmatpush.msra.mxu0 0.0
  %869 = vmatpush.msra.mxu0 %v853
  %870 = vmatpush.msra.mxu0 %v852
  %871 = vmatpush.msra.mxu0 %v851
  %872 = vmatpush.msra.mxu0 %v850
  %873 = vmatmul.f32.gmra.mxu0 %v855
  %v874 = vpop.f32.mrf.mxu0
  %v875 = vadd.f32 0.0, %v874
  %876 = vdwg.mxu0
  %v877 = vadd.f32 %v848, %v875
  %v878 = vld [vmem:[%s6] sm:$0x1]
  %v880 = vperm.slane %v878, 0
  %v882 = vadd.f32 %v877, %v880
  %v883 = vmax.f32 %v882, 0.0
  %884 = vst.msk [vmem:[%s11] sm:$0xff] %vm628, %v883
  %v885 = vld [vmem:[%s7] sm:$0xff]
  %v886 = vld [vmem:[%s7 + $0x8] sm:$0xff]
  %v887 = vld [vmem:[%s7 + $0x10] sm:$0xff]
  %v888 = vld [vmem:[%s7 + $0x18] sm:$0xff]
  %v889 = vld [vmem:[%s8] sm:$0x1]
  %v891 = vperm.slane %v889, 0
  %v894 = vsel %vm628, %v883, 0
  %896 = vmatpush.msra.mxu0 0.0
  %897 = vmatpush.msra.mxu0 0.0
  %898 = vmatpush.msra.mxu0 0.0
  %899 = vmatpush.msra.mxu0 0.0
  %900 = vmatpush.msra.mxu0 0.0
  %901 = vmatpush.msra.mxu0 0.0
  %902 = vmatpush.msra.mxu0 0.0
  %903 = vmatpush.msra.mxu0 0.0
  %904 = vmatpush.msra.mxu0 0.0
  %905 = vmatpush.msra.mxu0 0.0
  %906 = vmatpush.msra.mxu0 0.0
  %907 = vmatpush.msra.mxu0 0.0
  %908 = vmatpush.msra.mxu0 %v888
  %909 = vmatpush.msra.mxu0 %v887
  %910 = vmatpush.msra.mxu0 %v886
  %911 = vmatpush.msra.mxu0 %v885
  %912 = vmatmul.f32.gmra.mxu0 %v894
  %v913 = vpop.f32.mrf.mxu0
  %v914 = vadd.f32 %v891, %v913
  %915 = vdwg.mxu0
  %v916 = vmax.f32 %v914, 0.0
  %v917 = vld [vmem:[%s9] sm:$0xff]
  %v918 = vld [vmem:[%s9 + $0x8] sm:$0xff]
  %v919 = vld [vmem:[%s9 + $0x10] sm:$0xff]
  %v920 = vld [vmem:[%s9 + $0x18] sm:$0xff]
  %v921 = vld [vmem:[%s9 + $0x20] sm:$0xff]
  %v922 = vld [vmem:[%s9 + $0x28] sm:$0xff]
  %v923 = vld [vmem:[%s9 + $0x30] sm:$0xff]
  %v924 = vld [vmem:[%s9 + $0x38] sm:$0xff]
  %v925 = vld [vmem:[%s10] sm:$0x1]
  %v927 = vperm.slane %v925, 0
  %vm929 = vcmask 523264
  %v931 = vsel %vm929, %v916, 0
  %933 = vmatpush.msra.mxu0 0.0
  %934 = vmatpush.msra.mxu0 0.0
  %935 = vmatpush.msra.mxu0 0.0
  %936 = vmatpush.msra.mxu0 0.0
  %937 = vmatpush.msra.mxu0 0.0
  %938 = vmatpush.msra.mxu0 0.0
  %939 = vmatpush.msra.mxu0 0.0
  %940 = vmatpush.msra.mxu0 0.0
  %941 = vmatpush.msra.mxu0 %v924
  %942 = vmatpush.msra.mxu0 %v923
  %943 = vmatpush.msra.mxu0 %v922
  %944 = vmatpush.msra.mxu0 %v921
  %945 = vmatpush.msra.mxu0 %v920
  %946 = vmatpush.msra.mxu0 %v919
  %947 = vmatpush.msra.mxu0 %v918
  %948 = vmatpush.msra.mxu0 %v917
  %949 = vmatmul.f32.gmra.mxu0 %v931
  %v950 = vpop.f32.mrf.mxu0
  %v951 = vadd.f32 %v927, %v950
  %952 = vdwg.mxu0
  %vm953 = vcmask 48128
  %954 = vst.msk [vmem:[%s12] sm:$0xff] %vm953, %v951
  // Predicated region
  $region46: #{spr_policy_forward.1} parent=0 // pred_check
    _
  $region47: #{spr_policy_forward.1} parent=0 // pred_check_branch
    %956 = sbr.rel (0) target = $region49
  $region48: #{spr_policy_forward.1} parent=0 // pred_region
    _
  $region49: #{spr_policy_forward.1} parent=0 // pred_fallthru
    _
  // Predicated region
  $region50: #{spr_policy_forward.1} parent=0 // pred_check
    _
  $region51: #{spr_policy_forward.1} parent=0 // pred_check_branch
    %958 = sbr.rel (0) target = $region53
  $region52: #{spr_policy_forward.1} parent=0 // pred_region
    _
  $region53: #{spr_policy_forward.1} parent=0 // pred_fallthru
    _
  // Predicated region
  $region54: #{spr_policy_forward.1} parent=0 // pred_check
    _
  $region55: #{spr_policy_forward.1} parent=0 // pred_check_branch
    %960 = sbr.rel (0) target = $region57
  $region56: #{spr_policy_forward.1} parent=0 // pred_region
    _
  $region57: #{spr_policy_forward.1} parent=0 // pred_fallthru
    _
  // Predicated region
  $region58: #{spr_policy_forward.1} parent=0 // pred_check
    _
  $region59: #{spr_policy_forward.1} parent=0 // pred_check_branch
    %962 = sbr.rel (0) target = $region61
  $region60: #{spr_policy_forward.1} parent=0 // pred_region
    _
  $region61: #{spr_policy_forward.1} parent=0 // pred_fallthru
    _

</llo_original>
